<compile_context>
chip_gen: v7x
topology: tpu7x:2x2x1
jax: 0.10.0
libtpu: 0.0.40
codegen_flags: <defaults>
</compile_context>

<pallas_src>
import functools

import jax
import jax.numpy as jnp
from jax.experimental import pallas as pl
from jax.experimental.pallas import tpu as pltpu

LANES = 128          # lane width of the packed parameter slab
HIDDEN = 4           # QNetwork hidden size
HID8 = 8             # hidden size padded to one sublane group
_EXTRA_ROWS = 5 * 8  # b1(8) + W2(8) + b2(8) + W3(8) + b3(8) rows in the slab


def _round_up(n, m):
    return ((n + m - 1) // m) * m


# ----------------------------------------------------------------------------
# Kernel
# ----------------------------------------------------------------------------
def qnetwork_kernel(x_ref, wb_ref, out_ref, *, i8):
    """One batch tile: x (tile, i8) @ resident packed weights -> (tile, A)."""
    f32 = jnp.float32
    cdt = wb_ref.dtype                              # compute dtype (bf16)

    x = x_ref[...]                                  # (tile, i8)

    # Static, 8-aligned row slices into the resident packed parameter slab.
    w1 = wb_ref[0:i8, :]                            # (i8, 128)
    b1 = wb_ref[i8:i8 + 1, :].astype(f32)           # (1, 128)
    w2 = wb_ref[i8 + 8:i8 + 16, :]                  # (8, 128)
    b2 = wb_ref[i8 + 16:i8 + 17, :].astype(f32)     # (1, 128)
    w3 = wb_ref[i8 + 24:i8 + 32, :]                 # (8, 128)
    b3 = wb_ref[i8 + 32:i8 + 33, :].astype(f32)     # (1, 128)

    # bf16 MXU inputs, f32 accumulation, f32 bias/ReLU epilogue.
    h1 = jnp.maximum(jnp.dot(x, w1, preferred_element_type=f32) + b1, 0.0)
    h2 = jnp.maximum(
        jnp.dot(h1[:, :HID8].astype(cdt), w2, preferred_element_type=f32) + b2,
        0.0)
    q = jnp.dot(h2[:, :HID8].astype(cdt), w3, preferred_element_type=f32) + b3

    out_ref[...] = q[:, :out_ref.shape[-1]].astype(out_ref.dtype)


# ----------------------------------------------------------------------------
# Parameter packing: one lane-dense slab of shape (round_up(I, 8) + 40, 128)
# ----------------------------------------------------------------------------
def pack_params(params, input_size, num_actions, dtype=jnp.bfloat16):
    assert params["w1"].shape == (input_size, HIDDEN)
    assert params["w2"].shape == (HIDDEN, HIDDEN)
    assert params["w3"].shape == (HIDDEN, num_actions)
    assert HIDDEN <= HID8 and num_actions <= LANES

    i8 = _round_up(input_size, 8)
    slab = jnp.zeros((i8 + _EXTRA_ROWS, LANES), dtype)

    def put(s, row0, arr):
        return s.at[row0:row0 + arr.shape[0], 0:arr.shape[1]].set(
            arr.astype(dtype))

    slab = put(slab, 0, params["w1"])            # rows [0, input_size)
    slab = put(slab, i8, params["b1"])           # row  i8
    slab = put(slab, i8 + 8, params["w2"])       # rows [i8+8,  i8+8+HIDDEN)
    slab = put(slab, i8 + 16, params["b2"])      # row  i8+16
    slab = put(slab, i8 + 24, params["w3"])      # rows [i8+24, i8+24+HIDDEN)
    slab = put(slab, i8 + 32, params["b3"])      # row  i8+32
    return slab


# ----------------------------------------------------------------------------
# Wrapper
# ----------------------------------------------------------------------------
def _choose_tile(batch, batch_tile):
    tile = _round_up(max(batch_tile, 8), 8)      # sublane-aligned, defensively
    tile = min(tile, _round_up(batch, 8))
    if batch > 8:
        # Guarantee >= 2 grid steps so v7x's second TensorCore is used.
        tile = min(tile, _round_up(pl.cdiv(batch, 2), 8))
    return tile


def qnetwork_forward(x, packed_wb, num_actions, *, batch_tile=1024):
    """x: [batch, input_size] float, packed_wb: output of pack_params."""
    batch, input_size = x.shape
    i8 = packed_wb.shape[0] - _EXTRA_ROWS        # padded feature width

    # TODO(synk): produce x in bf16 upstream to avoid this extra cast pass.
    x = x.astype(packed_wb.dtype)
    if input_size < i8:                          # pad features to multiple of 8
        x = jnp.pad(x, ((0, 0), (0, i8 - input_size)))

    tile = _choose_tile(batch, batch_tile)
    grid = pl.cdiv(batch, tile)

    kernel = functools.partial(qnetwork_kernel, i8=i8)
    return pl.pallas_call(
        kernel,
        out_shape=jax.ShapeDtypeStruct((batch, num_actions), jnp.float32),
        grid=(grid,),
        in_specs=[
            # batch tile of activations, streamed per grid step
            pl.BlockSpec((tile, i8), lambda i: (i, 0)),
            # packed weights: constant index_map -> DMA'd once, VMEM-resident
            pl.BlockSpec(packed_wb.shape, lambda i: (0, 0)),
        ],
        # narrow (tile, num_actions) output: no padded-lane HBM writeback
        out_specs=pl.BlockSpec((tile, num_actions), lambda i: (i, 0)),
        compiler_params=pltpu.CompilerParams(
            dimension_semantics=("parallel",)),
    )(x, packed_wb)


# ----------------------------------------------------------------------------
# Init / reference
# ----------------------------------------------------------------------------
def init_params(key, input_size, num_actions=2):
    """Deterministic init mimicking PyTorch nn.Linear (uniform +/- 1/sqrt(fan_in))."""
    sizes = [(input_size, HIDDEN), (HIDDEN, HIDDEN), (HIDDEN, num_actions)]
    params = {}
    for idx, (fan_in, fan_out) in enumerate(sizes, start=1):
        key, kw, kb = jax.random.split(key, 3)
        bound = 1.0 / jnp.sqrt(jnp.float32(fan_in))
        params[f"w{idx}"] = jax.random.uniform(
            kw, (fan_in, fan_out), jnp.float32, -bound, bound)
        params[f"b{idx}"] = jax.random.uniform(
            kb, (1, fan_out), jnp.float32, -bound, bound)
    return params


def reference_forward(x, params, compute_dtype=jnp.bfloat16):
    """Pure-JAX reference mirroring the kernel math (bf16 inputs, f32 accum)."""
    f32 = jnp.float32

    def dense(a, w, b):
        return (jnp.dot(a.astype(compute_dtype), w.astype(compute_dtype),
                        preferred_element_type=f32)
                + b.astype(compute_dtype).astype(f32))

    h1 = jnp.maximum(dense(x, params["w1"], params["b1"]), 0.0)
    h2 = jnp.maximum(dense(h1, params["w2"], params["b2"]), 0.0)
    return dense(h2, params["w3"], params["b3"])


if __name__ == "__main__":
    key = jax.random.PRNGKey(0)
    key, kx, kp = jax.random.split(key, 3)

    # Small shapes; batch_tile=16 forces a multi-step grid with a ragged final
    # block (50 is not a tile multiple) to exercise the full pipeline.
    batch, input_size, num_actions = 50, 16, 2
    x = jax.random.normal(kx, (batch, input_size), jnp.float32)
    params = init_params(kp, input_size, num_actions)
    packed = pack_params(params, input_size, num_actions)
    ref = reference_forward(x, params)

    out = qnetwork_forward(x, packed, num_actions, batch_tile=16)
    out = jax.block_until_ready(out)
    assert out.shape == (batch, num_actions)
    assert jnp.allclose(out, ref, atol=1e-4, rtol=1e-4), \
        float(jnp.abs(out - ref).max())

    # Default-tile path: tile capped to round_up(cdiv(50, 2), 8) = 32 -> 2 steps.
    out2 = jax.block_until_ready(qnetwork_forward(x, packed, num_actions))
    assert jnp.allclose(out2, ref, atol=1e-4, rtol=1e-4), \
        float(jnp.abs(out2 - ref).max())

    print("KERNEL_OK")
</pallas_src>

<mosaic_0001>
module attributes {stable_mosaic.version = 11 : i64} {
  func.func @qnetwork_kernel(%arg0: i32, %arg1: memref<16x16xbf16, #tpu.memory_space<vmem>>, %arg2: memref<56x128xbf16, #tpu.memory_space<vmem>>, %arg3: memref<16x2xf32, #tpu.memory_space<vmem>>) attributes {dimension_semantics = [#tpu.dimension_semantics<parallel>], iteration_bounds = array<i64: 4>, scalar_prefetch = 0 : i64, scratch_operands = 0 : i64, tpu.core_type = #tpu.core_type<tc>, window_params = [{transform_indices = @transform_0, window_bounds = array<i64: 16, 16>}, {pipeline_mode = #tpu.pipeline_mode<synchronous>, transform_indices = @transform_1, window_bounds = array<i64: 56, 128>}, {transform_indices = @transform_2, window_bounds = array<i64: 16, 2>}]} {
    %c0 = arith.constant 0 : index
    %c0_0 = arith.constant 0 : index
    %0 = vector.load %arg1[%c0, %c0_0] : memref<16x16xbf16, #tpu.memory_space<vmem>>, vector<16x16xbf16>
    %c0_1 = arith.constant 0 : index
    %c0_2 = arith.constant 0 : index
    %1 = vector.load %arg2[%c0_1, %c0_2] : memref<56x128xbf16, #tpu.memory_space<vmem>>, vector<16x128xbf16>
    %c16 = arith.constant 16 : index
    %c0_3 = arith.constant 0 : index
    %2 = vector.load %arg2[%c16, %c0_3] : memref<56x128xbf16, #tpu.memory_space<vmem>>, vector<1x128xbf16>
    %3 = arith.extf %2 : vector<1x128xbf16> to vector<1x128xf32>
    %c24 = arith.constant 24 : index
    %c0_4 = arith.constant 0 : index
    %4 = vector.load %arg2[%c24, %c0_4] : memref<56x128xbf16, #tpu.memory_space<vmem>>, vector<8x128xbf16>
    %c32 = arith.constant 32 : index
    %c0_5 = arith.constant 0 : index
    %5 = vector.load %arg2[%c32, %c0_5] : memref<56x128xbf16, #tpu.memory_space<vmem>>, vector<1x128xbf16>
    %6 = arith.extf %5 : vector<1x128xbf16> to vector<1x128xf32>
    %c40 = arith.constant 40 : index
    %c0_6 = arith.constant 0 : index
    %7 = vector.load %arg2[%c40, %c0_6] : memref<56x128xbf16, #tpu.memory_space<vmem>>, vector<8x128xbf16>
    %c48 = arith.constant 48 : index
    %c0_7 = arith.constant 0 : index
    %8 = vector.load %arg2[%c48, %c0_7] : memref<56x128xbf16, #tpu.memory_space<vmem>>, vector<1x128xbf16>
    %9 = arith.extf %8 : vector<1x128xbf16> to vector<1x128xf32>
    %cst = arith.constant dense<0.000000e+00> : vector<16x128xf32>
    %10 = tpu.matmul %0, %1, %cst {dimension_numbers = #tpu.dot_dimension_numbers<[1], [0], [0], [1], [0, 0, 1, 1], [], []>} : vector<16x16xbf16>, vector<16x128xbf16>, vector<16x128xf32> -> vector<16x128xf32>
    %11 = vector.broadcast %3 : vector<1x128xf32> to vector<16x128xf32>
    %12 = arith.addf %10, %11 : vector<16x128xf32>
    %cst_8 = arith.constant 0.000000e+00 : f32
    %13 = vector.broadcast %cst_8 : f32 to vector<16x128xf32>
    %14 = arith.maximumf %12, %13 : vector<16x128xf32>
    %15 = vector.extract_strided_slice %14 {offsets = [0, 0], sizes = [16, 8], strides = [1, 1]} : vector<16x128xf32> to vector<16x8xf32>
    %16 = arith.truncf %15 : vector<16x8xf32> to vector<16x8xbf16>
    %cst_9 = arith.constant dense<0.000000e+00> : vector<16x128xf32>
    %17 = tpu.matmul %16, %4, %cst_9 {dimension_numbers = #tpu.dot_dimension_numbers<[1], [0], [0], [1], [0, 0, 1, 1], [], []>} : vector<16x8xbf16>, vector<8x128xbf16>, vector<16x128xf32> -> vector<16x128xf32>
    %18 = vector.broadcast %6 : vector<1x128xf32> to vector<16x128xf32>
    %19 = arith.addf %17, %18 : vector<16x128xf32>
    %cst_10 = arith.constant 0.000000e+00 : f32
    %20 = vector.broadcast %cst_10 : f32 to vector<16x128xf32>
    %21 = arith.maximumf %19, %20 : vector<16x128xf32>
    %22 = vector.extract_strided_slice %21 {offsets = [0, 0], sizes = [16, 8], strides = [1, 1]} : vector<16x128xf32> to vector<16x8xf32>
    %23 = arith.truncf %22 : vector<16x8xf32> to vector<16x8xbf16>
    %cst_11 = arith.constant dense<0.000000e+00> : vector<16x128xf32>
    %24 = tpu.matmul %23, %7, %cst_11 {dimension_numbers = #tpu.dot_dimension_numbers<[1], [0], [0], [1], [0, 0, 1, 1], [], []>} : vector<16x8xbf16>, vector<8x128xbf16>, vector<16x128xf32> -> vector<16x128xf32>
    %25 = vector.broadcast %9 : vector<1x128xf32> to vector<16x128xf32>
    %26 = arith.addf %24, %25 : vector<16x128xf32>
    %27 = vector.extract_strided_slice %26 {offsets = [0, 0], sizes = [16, 2], strides = [1, 1]} : vector<16x128xf32> to vector<16x2xf32>
    %c0_12 = arith.constant 0 : index
    %c0_13 = arith.constant 0 : index
    %28 = vector.load %arg3[%c0_12, %c0_13] : memref<16x2xf32, #tpu.memory_space<vmem>>, vector<16x2xf32>
    tpu.vector_store %arg3[%c0_12, %c0_13], %27 {strides = array<i32>} : memref<16x2xf32, #tpu.memory_space<vmem>>, vector<16x2xf32>,
    return
  }
  func.func @transform_0(%arg0: i32) -> (i32, i32) {
    %c0_i32 = arith.constant 0 : i32
    %c0_i32_0 = arith.constant 0 : i32
    return %arg0, %c0_i32 : i32, i32
  }
  func.func @transform_1(%arg0: i32) -> (i32, i32) {
    %c0_i32 = arith.constant 0 : i32
    %c0_i32_0 = arith.constant 0 : i32
    %c0_i32_1 = arith.constant 0 : i32
    return %c0_i32, %c0_i32_0 : i32, i32
  }
  func.func @transform_2(%arg0: i32) -> (i32, i32) {
    %c0_i32 = arith.constant 0 : i32
    %c0_i32_0 = arith.constant 0 : i32
    return %arg0, %c0_i32 : i32, i32
  }
}

</mosaic_0001>

<llo_original>
// kernel: tpu_custom_call.1
$region0: #{tpu_custom_call.1}
  #allocation0 [shape = 'u32[]', space=smem, size = 0x4, offset = 0x4, fixed_abs, tag = 'smem constant byte address 0x4 - core index']
  #allocation1 [shape = 'u32[144,128]{1,0:T(1,128)}', space=vmem, size = 0x12000, scoped, tag = 'internal scratch']
  %s0 = inlined_call_operand.vmem [shape: bf16[50,16], index: 0, kind: input, shape index: {}]
  %s1 = inlined_call_operand.vmem [shape: bf16[56,128], index: 1, kind: input, shape index: {}]
  %s2 = inlined_call_operand.vmem [shape: f32[50,2], index: 2, kind: output, shape index: {}]
  %s3 = sld [smem:[#allocation0]]
  $region89: #{tpu_custom_call.1} parent=0
    _
  %s5 = ssub.s32 1, %s3
  %s6 = scalar_select 0, %s5, %s3
  $region1: #{tpu_custom_call.1} parent=0
    #allocation2 [shape = 'u8[16384]{0}', space=vmem, size = 0x4000, scoped, tag = 'output window, operand 0']
    loop: start=0, step=1, limit=6
    $region2: #{tpu_custom_call.1} parent=1 // loop_pre_header
      _
    $region3: #{tpu_custom_call.1} parent=1 // loop_header
      %s8 = sphi 0, %s12
      %p9 = scmp.ge.s32.totalorder %s8, 6
      %s18 = sphi 0, %s20
      %s21 = sphi 0, %s18
      %s22 = sphi 0, %s21
      %s38 = sphi 0, %s22
      %s42 = sphi 0, %s42
      %s44 = sphi 0, %s42
      %s45 = sphi 0, %s44
      %s59 = sphi 0, %s45
      %s65 = sphi 0, %s67
      %s68 = sphi 0, %s65
      %s69 = sphi 0, %s68
      %s85 = sphi 0, %s69
    $region4: #{tpu_custom_call.1} parent=1 // loop_header_branch
      %11 = sbr.rel (%p9) target = $region8
    $region5: #{tpu_custom_call.1} parent=1 // loop_body
      %s13 = ssub.s32 %s8, 1
      %s14 = ssub.s32 %s8, 2
      %s15 = sadd.s32 %s8, 1
      %s16 = ssub.s32 %s8, %s15
      %p17 = scmp.eq.s32.totalorder %s16, 0
      %s19 = sadd.s32 %s18, 1
      %s20 = scalar_select %p17, %s18, %s19
      %p23 = pneg %p17
      %p24 = scmp.eq.s32.totalorder %s8, 3
      %p25 = por %p23, %p24
      %p26 = scmp.ne.s32.totalorder %s18, %s21
      %p27 = scmp.eq.s32.totalorder %s8, 0
      %p28 = por %p26, %p27
      %p29 = scmp.ne.s32.totalorder %s18, %s21
      %p30 = scmp.eq.s32.totalorder %s13, 3
      %p31 = por %p29, %p30
      %p32 = scmp.ne.s32.totalorder %s21, %s22
      %p33 = scmp.eq.s32.totalorder %s13, 0
      %p34 = por %p32, %p33
      %p35 = scmp.ne.s32.totalorder %s21, %s22
      %p36 = scmp.eq.s32.totalorder %s14, 3
      %p37 = por %p35, %p36
      %p39 = scmp.ne.s32.totalorder %s22, %s38
      %p40 = scmp.eq.s32.totalorder %s14, 0
      %p41 = por %p39, %p40
      %s43 = sadd.s32 %s42, 1
      %p46 = scmp.eq.s32.totalorder %s8, 3
      %p47 = scmp.ne.s32.totalorder %s42, %s44
      %p48 = scmp.eq.s32.totalorder %s8, 0
      %p49 = por %p47, %p48
      %p50 = scmp.ne.s32.totalorder %s42, %s44
      %p51 = scmp.eq.s32.totalorder %s13, 3
      %p52 = por %p50, %p51
      %p53 = scmp.ne.s32.totalorder %s44, %s45
      %p54 = scmp.eq.s32.totalorder %s13, 0
      %p55 = por %p53, %p54
      %p56 = scmp.ne.s32.totalorder %s44, %s45
      %p57 = scmp.eq.s32.totalorder %s14, 3
      %p58 = por %p56, %p57
      %p60 = scmp.ne.s32.totalorder %s45, %s59
      %p61 = scmp.eq.s32.totalorder %s14, 0
      %p62 = por %p60, %p61
      %s63 = ssub.s32 %s8, %s15
      %p64 = scmp.eq.s32.totalorder %s63, 0
      %s66 = sadd.s32 %s65, 1
      %s67 = scalar_select %p64, %s65, %s66
      %p70 = pneg %p64
      %p71 = scmp.eq.s32.totalorder %s8, 3
      %p72 = por %p70, %p71
      %p73 = scmp.ne.s32.totalorder %s65, %s68
      %p74 = scmp.eq.s32.totalorder %s8, 0
      %p75 = por %p73, %p74
      %p76 = scmp.ne.s32.totalorder %s65, %s68
      %p77 = scmp.eq.s32.totalorder %s13, 3
      %p78 = por %p76, %p77
      %p79 = scmp.ne.s32.totalorder %s68, %s69
      %p80 = scmp.eq.s32.totalorder %s13, 0
      %p81 = por %p79, %p80
      %p82 = scmp.ne.s32.totalorder %s68, %s69
      %p83 = scmp.eq.s32.totalorder %s14, 3
      %p84 = por %p82, %p83
      %p86 = scmp.ne.s32.totalorder %s69, %s85
      %p87 = scmp.eq.s32.totalorder %s14, 0
      %p88 = por %p86, %p87
      %p89 = scmp.le.s32.totalorder 1, %s8
      %p90 = scmp.lt.s32.totalorder %s8, 5
      %p91 = pnand %p89, %p90
      %p92 = pneg %p91
      // Predicated region
      $region9: #{tpu_custom_call.1} parent=5 // pred_check
        _
      $region10: #{tpu_custom_call.1} parent=5 // pred_check_branch
        %94 = sbr.rel (%p91) target = $region12
      $region11: #{tpu_custom_call.1} parent=5 // pred_region
        %s95 = ssub.s32 %s8, 1
        // Predicated region
        $region13: #{tpu_custom_call.1} parent=11 // pred_check
          %p96 = pneg %p55
        $region14: #{tpu_custom_call.1} parent=11 // pred_check_branch
          %98 = sbr.rel (%p96) target = $region16
        $region15: #{tpu_custom_call.1} parent=11 // pred_region
          _
        $region16: #{tpu_custom_call.1} parent=11 // pred_fallthru
          _
      $region12: #{tpu_custom_call.1} parent=5 // pred_fallthru
        _
      %p99 = scmp.lt.s32.totalorder %s8, 4
      // Predicated region
      $region17: #{tpu_custom_call.1} parent=5 // pred_check
        %p100 = pneg %p99
      $region18: #{tpu_custom_call.1} parent=5 // pred_check_branch
        %102 = sbr.rel (%p100) target = $region20
      $region19: #{tpu_custom_call.1} parent=5 // pred_region
        // Predicated region
        $region21: #{tpu_custom_call.1} parent=19 // pred_check
          %p103 = pneg %p28
        $region22: #{tpu_custom_call.1} parent=19 // pred_check_branch
          %105 = sbr.rel (%p103) target = $region24
        $region23: #{tpu_custom_call.1} parent=19 // pred_region
          %s106 = smul.u32 2, %s8
          %s107 = ssub.s32 7, %s106
          %p108 = scmp.lt.s32.totalorder %s107, 2
          %s109 = scalar_select %p108, %s107, 2
          %s110 = smul.u32 64, %s109
          %p111 = scmp.lt.s32.totalorder %s106, 6
          %s112 = scalar_select %p111, %s106, 6
          %s113 = smul.addr %s112, 4
          %s114 = scalar_lea.vmem %s0, %s113
          %s115 = smul.u32 2, %s8
          %s116 = ssub.s32 7, %s115
          %p117 = scmp.lt.s32.totalorder %s116, 2
          %s118 = scalar_select %p117, %s116, 2
          %s119 = smul.u32 64, %s118
        $region24: #{tpu_custom_call.1} parent=19 // pred_fallthru
          _
      $region20: #{tpu_custom_call.1} parent=5 // pred_fallthru
        _
      %p120 = scmp.le.s32.totalorder 1, %s8
      %p121 = scmp.lt.s32.totalorder %s8, 5
      %p122 = pnand %p120, %p121
      %p123 = pneg %p122
      // Predicated region
      $region25: #{tpu_custom_call.1} parent=5 // pred_check
        _
      $region26: #{tpu_custom_call.1} parent=5 // pred_check_branch
        %125 = sbr.rel (%p122) target = $region28
      $region27: #{tpu_custom_call.1} parent=5 // pred_region
        %s126 = ssub.s32 %s8, 1
        %s127 = smul.u32 2, %s13
        %s128 = ssub.s32 7, %s127
        %p129 = scmp.lt.s32.totalorder %s128, 2
        %s130 = scalar_select %p129, %s128, 2
        %s131 = smul.u32 64, %s130
        %p132 = scmp.lt.s32.totalorder %s127, 6
        %s133 = scalar_select %p132, %s127, 6
        %s134 = smul.addr %s133, 4
        %s135 = scalar_lea.vmem %s0, %s134
        %p136 = pneg %p34
        %p137 = pneg %p31
        %p138 = pneg %p55
        %p139 = pneg %p52
        %p140 = pneg %p81
        %p141 = pneg %p78
        %s142 = sand.u32 %s68, 1
        %s143 = sand.u32 %s68, 1
        %s144 = smul.addr %s143, 16
        %s145 = scalar_lea.vmem [#allocation2], %s144
        %s146 = smul.u32 2, %s13
        %s147 = ssub.s32 7, %s146
        %p148 = scmp.lt.s32.totalorder %s147, 2
        %s149 = scalar_select %p148, %s147, 2
        %s150 = smul.u32 64, %s149
        %p151 = scmp.lt.s32.totalorder %s146, 6
        %s152 = scalar_select %p151, %s146, 6
        %s153 = smul.addr %s152, 4
        %s154 = scalar_lea.vmem %s0, %s153
        %s155 = smul.u32 2, %s13
        %s156 = ssub.s32 7, %s155
        %p157 = scmp.lt.s32.totalorder %s156, 2
        %s158 = scalar_select %p157, %s156, 2
        %s159 = smul.u32 64, %s158
        %s160 = smul.u32 2, %s13
        %s161 = ssub.s32 7, %s160
        %p162 = scmp.lt.s32.totalorder %s161, 2
        %s163 = scalar_select %p162, %s161, 2
        %s164 = smul.u32 128, %s163
        %v166 = vld [vmem:[%s154] sm:$0xf]
        %v167 = vld [vmem:[%s154 + $0x4] sm:$0xf]
        %v168 = vld [vmem:[%s1] sm:$0xf]
        %v169 = vld [vmem:[%s1 + $0x4] sm:$0xf]
        %v170 = vld [vmem:[%s1 + $0x8] sm:$0x1]
        %v171 = vunpack.c.l.bf16 %v170
        %v172 = vld [vmem:[%s1 + $0xc] sm:$0xf]
        %v173 = vld [vmem:[%s1 + $0x10] sm:$0x1]
        %v174 = vunpack.c.l.bf16 %v173
        %v175 = vld [vmem:[%s1 + $0x14] sm:$0xf]
        %v176 = vld [vmem:[%s1 + $0x18] sm:$0x1]
        %v177 = vunpack.c.l.bf16 %v176
        %v178 = vlaneseq
        %v179 = vshrl.u32 %v178, 7
        %v180 = vsub.s32 0, %v179
        %v181 = vrot.slane %v171, %v180
        %v184 = vunpack.c.l.b16 %v166
        %v185 = vunpack.c.l.b16 %v167
        %v186 = vpack.c.b16 %v185, %v184
        %v189 = vunpack.c.l.b16 %v168
        %v190 = vunpack.c.l.b16 %v169
        %v191 = vpack.c.b16 %v190, %v189
        %vm193 = vcmask 130048
        %v195 = vsel %vm193, %v186, 0
        %197 = vmatprep.subr.bf16.mxu0 0
        %198 = vmatpush1.bf16.msra.mxu0 %v191
        %199 = vmatprep.subr.bf16.mxu0 0
        %200 = vmatpush1.bf16.msra.mxu0 0
        %201 = vmatprep.subr.bf16.mxu0 0
        %202 = vmatpush1.bf16.msra.mxu0 0
        %203 = vmatprep.subr.bf16.mxu0 0
        %204 = vmatpush1.bf16.msra.mxu0 0
        %205 = vmatprep.subr.bf16.mxu0 0
        %206 = vmatpush1.bf16.msra.mxu0 0
        %207 = vmatprep.subr.bf16.mxu0 0
        %208 = vmatpush1.bf16.msra.mxu0 0
        %209 = vmatprep.subr.bf16.mxu0 0
        %210 = vmatpush1.bf16.msra.mxu0 0
        %211 = vmatprep.subr.bf16.mxu0 0
        %212 = vmatpush1.bf16.msra.mxu0 0
        %213 = vmatprep.subr.bf16.mxu0 0
        %214 = vmatpush1.bf16.msra.mxu0 0
        %215 = vmatprep.subr.bf16.mxu0 0
        %216 = vmatpush1.bf16.msra.mxu0 0
        %217 = vmatprep.subr.bf16.mxu0 0
        %218 = vmatpush1.bf16.msra.mxu0 0
        %219 = vmatprep.subr.bf16.mxu0 0
        %220 = vmatpush1.bf16.msra.mxu0 0
        %221 = vmatprep.subr.bf16.mxu0 0
        %222 = vmatpush1.bf16.msra.mxu0 0
        %223 = vmatprep.subr.bf16.mxu0 0
        %224 = vmatpush1.bf16.msra.mxu0 0
        %225 = vmatprep.subr.bf16.mxu0 0
        %226 = vmatpush1.bf16.msra.mxu0 0
        %227 = vmatprep.subr.bf16.mxu0 0
        %228 = vmatpush1.bf16.msra.mxu0 0
        %229 = vmatprep.mubr.bf16.mxu0 0
        %230 = vmatmul.mubr.bf16.gmra.mrb[0].mxu0 %v195
        %v231 = vpop.f32.mrb[0].mxu0
        %v232 = vadd.f32 %v181, %v231
        %v233 = vpop.f32.mrb[0].mxu0
        %v234 = vpop.f32.mrb[0].mxu0
        %v235 = vadd.f32 %v181, %v234
        %v236 = vpop.f32.mrb[0].mxu0
        %237 = vdwg.mxu0
        %v238 = vmax.f32 %v232, 0.0
        %v239 = vmax.f32 %v235, 0.0
        %v240 = vpack.c.bf16 %v239, %v238
        %v241 = vlaneseq
        %v242 = vshrl.u32 %v241, 7
        %v243 = vsub.s32 0, %v242
        %v244 = vrot.slane %v174, %v243
        %vm245 = vcmask 64512
        %v247 = vsel %vm245, %v240, 0
        %vm249 = vcmask 1043456
        %v251 = vsel %vm249, %v172, 0
        %253 = vmatprep.subr.bf16.mxu0 0
        %254 = vmatpush1.bf16.msra.mxu0 %v251
        %255 = vmatprep.subr.bf16.mxu0 0
        %256 = vmatpush1.bf16.msra.mxu0 0
        %257 = vmatprep.subr.bf16.mxu0 0
        %258 = vmatpush1.bf16.msra.mxu0 0
        %259 = vmatprep.subr.bf16.mxu0 0
        %260 = vmatpush1.bf16.msra.mxu0 0
        %261 = vmatprep.subr.bf16.mxu0 0
        %262 = vmatpush1.bf16.msra.mxu0 0
        %263 = vmatprep.subr.bf16.mxu0 0
        %264 = vmatpush1.bf16.msra.mxu0 0
        %265 = vmatprep.subr.bf16.mxu0 0
        %266 = vmatpush1.bf16.msra.mxu0 0
        %267 = vmatprep.subr.bf16.mxu0 0
        %268 = vmatpush1.bf16.msra.mxu0 0
        %269 = vmatprep.subr.bf16.mxu0 0
        %270 = vmatpush1.bf16.msra.mxu0 0
        %271 = vmatprep.subr.bf16.mxu0 0
        %272 = vmatpush1.bf16.msra.mxu0 0
        %273 = vmatprep.subr.bf16.mxu0 0
        %274 = vmatpush1.bf16.msra.mxu0 0
        %275 = vmatprep.subr.bf16.mxu0 0
        %276 = vmatpush1.bf16.msra.mxu0 0
        %277 = vmatprep.subr.bf16.mxu0 0
        %278 = vmatpush1.bf16.msra.mxu0 0
        %279 = vmatprep.subr.bf16.mxu0 0
        %280 = vmatpush1.bf16.msra.mxu0 0
        %281 = vmatprep.subr.bf16.mxu0 0
        %282 = vmatpush1.bf16.msra.mxu0 0
        %283 = vmatprep.subr.bf16.mxu0 0
        %284 = vmatpush1.bf16.msra.mxu0 0
        %285 = vmatprep.mubr.bf16.mxu0 0
        %286 = vmatmul.mubr.bf16.gmra.mrb[0].mxu0 %v247
        %v287 = vpop.f32.mrb[0].mxu0
        %v288 = vadd.f32 %v244, %v287
        %v289 = vpop.f32.mrb[0].mxu0
        %v290 = vpop.f32.mrb[0].mxu0
        %v291 = vadd.f32 %v244, %v290
        %v292 = vpop.f32.mrb[0].mxu0
        %293 = vdwg.mxu0
        %v294 = vmax.f32 %v288, 0.0
        %v295 = vmax.f32 %v291, 0.0
        %v296 = vpack.c.bf16 %v295, %v294
        %v297 = vlaneseq
        %v298 = vshrl.u32 %v297, 7
        %v299 = vsub.s32 0, %v298
        %v300 = vrot.slane %v177, %v299
        %v302 = vsel %vm245, %v296, 0
        %v305 = vsel %vm249, %v175, 0
        %307 = vmatprep.subr.bf16.mxu0 0
        %308 = vmatpush1.bf16.msra.mxu0 %v305
        %309 = vmatprep.subr.bf16.mxu0 0
        %310 = vmatpush1.bf16.msra.mxu0 0
        %311 = vmatprep.subr.bf16.mxu0 0
        %312 = vmatpush1.bf16.msra.mxu0 0
        %313 = vmatprep.subr.bf16.mxu0 0
        %314 = vmatpush1.bf16.msra.mxu0 0
        %315 = vmatprep.subr.bf16.mxu0 0
        %316 = vmatpush1.bf16.msra.mxu0 0
        %317 = vmatprep.subr.bf16.mxu0 0
        %318 = vmatpush1.bf16.msra.mxu0 0
        %319 = vmatprep.subr.bf16.mxu0 0
        %320 = vmatpush1.bf16.msra.mxu0 0
        %321 = vmatprep.subr.bf16.mxu0 0
        %322 = vmatpush1.bf16.msra.mxu0 0
        %323 = vmatprep.subr.bf16.mxu0 0
        %324 = vmatpush1.bf16.msra.mxu0 0
        %325 = vmatprep.subr.bf16.mxu0 0
        %326 = vmatpush1.bf16.msra.mxu0 0
        %327 = vmatprep.subr.bf16.mxu0 0
        %328 = vmatpush1.bf16.msra.mxu0 0
        %329 = vmatprep.subr.bf16.mxu0 0
        %330 = vmatpush1.bf16.msra.mxu0 0
        %331 = vmatprep.subr.bf16.mxu0 0
        %332 = vmatpush1.bf16.msra.mxu0 0
        %333 = vmatprep.subr.bf16.mxu0 0
        %334 = vmatpush1.bf16.msra.mxu0 0
        %335 = vmatprep.subr.bf16.mxu0 0
        %336 = vmatpush1.bf16.msra.mxu0 0
        %337 = vmatprep.subr.bf16.mxu0 0
        %338 = vmatpush1.bf16.msra.mxu0 0
        %339 = vmatprep.mubr.bf16.mxu0 0
        %340 = vmatmul.mubr.bf16.gmra.mrb[0].mxu0 %v302
        %v341 = vpop.f32.mrb[0].mxu0
        %v342 = vadd.f32 %v300, %v341
        %v343 = vpop.f32.mrb[0].mxu0
        %v344 = vpop.f32.mrb[0].mxu0
        %v345 = vadd.f32 %v300, %v344
        %v346 = vpop.f32.mrb[0].mxu0
        %347 = vdwg.mxu0
        %vm348 = vcmask 15360
        %349 = vst.msk [vmem:[%s145] sm:$0xff] %vm348, %v342
        %350 = vst.msk [vmem:[%s145 + $0x8] sm:$0xff] %vm348, %v345
        %s351 = sand.u32 %s68, 1
        %s352 = sand.u32 %s68, 1
        %s353 = smul.addr %s352, 16
        %s354 = scalar_lea.vmem [#allocation2], %s353
        // Predicated region
        $region29: #{tpu_custom_call.1} parent=27 // pred_check
          %p355 = pneg %p78
        $region30: #{tpu_custom_call.1} parent=27 // pred_check_branch
          %357 = sbr.rel (%p355) target = $region32
        $region31: #{tpu_custom_call.1} parent=27 // pred_region
          %s358 = smul.u32 2, %s13
          %s359 = ssub.s32 7, %s358
          %p360 = scmp.lt.s32.totalorder %s359, 2
          %s361 = scalar_select %p360, %s359, 2
          %s362 = smul.u32 128, %s361
          %p363 = scmp.ne.s32.totalorder 0, %s362
          %s364 = smul.addr %s358, 8
          %s365 = scalar_lea.vmem %s2, %s364
          // Predicated region
          $region33: #{tpu_custom_call.1} parent=31 // pred_check
            %p366 = pneg %p363
          $region34: #{tpu_custom_call.1} parent=31 // pred_check_branch
            %368 = sbr.rel (%p366) target = $region36
          $region35: #{tpu_custom_call.1} parent=31 // pred_region
            // Predicated region
            $region37: #{tpu_custom_call.1} parent=35 // pred_check
              _
            $region38: #{tpu_custom_call.1} parent=35 // pred_check_branch
              %370 = sbr.rel (0) target = $region40
            $region39: #{tpu_custom_call.1} parent=35 // pred_region
              // Predicated region
              $region59: #{tpu_custom_call.1} parent=39 // pred_check
                _
              $region60: #{tpu_custom_call.1} parent=39 // pred_check_branch
                %421 = sbr.rel (0) target = $region62
              $region61: #{tpu_custom_call.1} parent=39 // pred_region
                %s422 = sshrl.u32 %s361, 1
                // While loop
                $region63: #{tpu_custom_call.1} parent=61 // loop_pre_header
                  _
                $region64: #{tpu_custom_call.1} parent=61 // loop_header
                  %s424 = sphi 0, %s426
                  %p425 = scmp.ge.s32.totalorder %s424, %s422
                  %s429 = sphi 0, %s438
                  %s430 = sphi %s354, %s441
                  %s431 = sphi %s365, %s442
                $region65: #{tpu_custom_call.1} parent=61 // loop_header_branch
                  %428 = sbr.rel (%p425) target = $region69
                $region66: #{tpu_custom_call.1} parent=61 // loop_body
                  %v432 = vld [vmem:[%s430] sm:$0xff]
                  %433 = vst [vmem:[%s431] sm:$0xff] %v432
                  %v434 = vld [vmem:[%s430 + $0x8] sm:$0xff]
                  %435 = vst [vmem:[%s431 + $0x8] sm:$0xff] %v434
                  %s436 = sadd.s32 1, %s429
                  %p437 = scmp.ge.s32.totalorder %s436, %s422
                  %s438 = scalar_select %p437, 0, %s436
                  %s439 = smul.u32 %s438, 16
                  %s440 = smul.u32 %s438, 16
                  %s441 = scalar_lea.vmem %s354, %s439 [#allocation2]
                  %s442 = scalar_lea.vmem %s365, %s440
                $region67: #{tpu_custom_call.1} parent=61 // loop_footer
                  %s426 = sadd.s32 %s424, 1
                $region68: #{tpu_custom_call.1} parent=61 // loop_footer_branch
                  %423 = sbr.rel target = $region64
                $region69: #{tpu_custom_call.1} parent=61 // loop_exit
                  _
                %s443 = sshrl.u32 %s361, 1
                %s444 = sand.u32 %s361, 1
                %s445 = smul.u32 %s443, 2
                %s446 = smul.u32 8, %s445
                %s447 = scalar_lea.vmem %s354, %s446 [#allocation2]
                %s448 = smul.u32 8, %s445
                %s449 = scalar_lea.vmem %s365, %s448
                // While loop
                $region70: #{tpu_custom_call.1} parent=61 // loop_pre_header
                  _
                $region71: #{tpu_custom_call.1} parent=61 // loop_header
                  %s451 = sphi 0, %s453
                  %p452 = scmp.ge.s32.totalorder %s451, %s444
                  %s456 = sphi 0, %s463
                  %s457 = sphi %s447, %s466
                  %s458 = sphi %s449, %s467
                $region72: #{tpu_custom_call.1} parent=61 // loop_header_branch
                  %455 = sbr.rel (%p452) target = $region76
                $region73: #{tpu_custom_call.1} parent=61 // loop_body
                  %v459 = vld [vmem:[%s457] sm:$0xff]
                  %460 = vst [vmem:[%s458] sm:$0xff] %v459
                  %s461 = sadd.s32 1, %s456
                  %p462 = scmp.ge.s32.totalorder %s461, %s444
                  %s463 = scalar_select %p462, 0, %s461
                  %s464 = smul.u32 %s463, 8
                  %s465 = smul.u32 %s463, 8
                  %s466 = scalar_lea.vmem %s447, %s464 [#allocation2]
                  %s467 = scalar_lea.vmem %s449, %s465
                $region74: #{tpu_custom_call.1} parent=61 // loop_footer
                  %s453 = sadd.s32 %s451, 1
                $region75: #{tpu_custom_call.1} parent=61 // loop_footer_branch
                  %450 = sbr.rel target = $region71
                $region76: #{tpu_custom_call.1} parent=61 // loop_exit
                  _
              $region62: #{tpu_custom_call.1} parent=39 // pred_fallthru
                _
              // Predicated region
              $region77: #{tpu_custom_call.1} parent=39 // pred_check
                _
              $region78: #{tpu_custom_call.1} parent=39 // pred_check_branch
                %469 = sbr.rel target = $region80
              $region79: #{tpu_custom_call.1} parent=39 // pred_region
                _
              $region80: #{tpu_custom_call.1} parent=39 // pred_fallthru
                _
            $region40: #{tpu_custom_call.1} parent=35 // pred_fallthru
              _
            // Predicated region
            $region41: #{tpu_custom_call.1} parent=35 // pred_check
              _
            $region42: #{tpu_custom_call.1} parent=35 // pred_check_branch
              %372 = sbr.rel target = $region44
            $region43: #{tpu_custom_call.1} parent=35 // pred_region
              %s374 = sshrl.u32 %s361, 1
              // While loop
              $region45: #{tpu_custom_call.1} parent=43 // loop_pre_header
                _
              $region46: #{tpu_custom_call.1} parent=43 // loop_header
                %s376 = sphi 0, %s378
                %p377 = scmp.ge.s32.totalorder %s376, %s374
                %s381 = sphi 0, %s390
                %s382 = sphi %s354, %s393
                %s383 = sphi %s365, %s394
              $region47: #{tpu_custom_call.1} parent=43 // loop_header_branch
                %380 = sbr.rel (%p377) target = $region51
              $region48: #{tpu_custom_call.1} parent=43 // loop_body
                %v384 = vld [vmem:[%s382] sm:$0xff]
                %385 = vst [vmem:[%s383] sm:$0xff] %v384
                %v386 = vld [vmem:[%s382 + $0x8] sm:$0xff]
                %387 = vst [vmem:[%s383 + $0x8] sm:$0xff] %v386
                %s388 = sadd.s32 1, %s381
                %p389 = scmp.ge.s32.totalorder %s388, %s374
                %s390 = scalar_select %p389, 0, %s388
                %s391 = smul.u32 %s390, 16
                %s392 = smul.u32 %s390, 16
                %s393 = scalar_lea.vmem %s354, %s391 [#allocation2]
                %s394 = scalar_lea.vmem %s365, %s392
              $region49: #{tpu_custom_call.1} parent=43 // loop_footer
                %s378 = sadd.s32 %s376, 1
              $region50: #{tpu_custom_call.1} parent=43 // loop_footer_branch
                %375 = sbr.rel target = $region46
              $region51: #{tpu_custom_call.1} parent=43 // loop_exit
                _
              %s395 = sshrl.u32 %s361, 1
              %s396 = sand.u32 %s361, 1
              %s397 = smul.u32 %s395, 2
              %s398 = smul.u32 8, %s397
              %s399 = scalar_lea.vmem %s354, %s398 [#allocation2]
              %s400 = smul.u32 8, %s397
              %s401 = scalar_lea.vmem %s365, %s400
              // While loop
              $region52: #{tpu_custom_call.1} parent=43 // loop_pre_header
                _
              $region53: #{tpu_custom_call.1} parent=43 // loop_header
                %s403 = sphi 0, %s405
                %p404 = scmp.ge.s32.totalorder %s403, %s396
                %s408 = sphi 0, %s415
                %s409 = sphi %s399, %s418
                %s410 = sphi %s401, %s419
              $region54: #{tpu_custom_call.1} parent=43 // loop_header_branch
                %407 = sbr.rel (%p404) target = $region58
              $region55: #{tpu_custom_call.1} parent=43 // loop_body
                %v411 = vld [vmem:[%s409] sm:$0xff]
                %412 = vst [vmem:[%s410] sm:$0xff] %v411
                %s413 = sadd.s32 1, %s408
                %p414 = scmp.ge.s32.totalorder %s413, %s396
                %s415 = scalar_select %p414, 0, %s413
                %s416 = smul.u32 %s415, 8
                %s417 = smul.u32 %s415, 8
                %s418 = scalar_lea.vmem %s399, %s416 [#allocation2]
                %s419 = scalar_lea.vmem %s401, %s417
              $region56: #{tpu_custom_call.1} parent=43 // loop_footer
                %s405 = sadd.s32 %s403, 1
              $region57: #{tpu_custom_call.1} parent=43 // loop_footer_branch
                %402 = sbr.rel target = $region53
              $region58: #{tpu_custom_call.1} parent=43 // loop_exit
                _
            $region44: #{tpu_custom_call.1} parent=35 // pred_fallthru
              _
          $region36: #{tpu_custom_call.1} parent=31 // pred_fallthru
            _
          %470 = vnop
        $region32: #{tpu_custom_call.1} parent=27 // pred_fallthru
          _
      $region28: #{tpu_custom_call.1} parent=5 // pred_fallthru
        _
      %p471 = scmp.le.s32.totalorder 2, %s8
      // Predicated region
      $region81: #{tpu_custom_call.1} parent=5 // pred_check
        %p472 = pneg %p471
      $region82: #{tpu_custom_call.1} parent=5 // pred_check_branch
        %474 = sbr.rel (%p472) target = $region84
      $region83: #{tpu_custom_call.1} parent=5 // pred_region
        %s475 = ssub.s32 %s8, 2
        // Predicated region
        $region85: #{tpu_custom_call.1} parent=83 // pred_check
          %p476 = pneg %p84
        $region86: #{tpu_custom_call.1} parent=83 // pred_check_branch
          %478 = sbr.rel (%p476) target = $region88
        $region87: #{tpu_custom_call.1} parent=83 // pred_region
          %s479 = sand.u32 %s69, 1
          %s480 = sand.u32 %s69, 1
          %s481 = smul.addr %s480, 16
          %s482 = scalar_lea.vmem [#allocation2], %s481
        $region88: #{tpu_custom_call.1} parent=83 // pred_fallthru
          _
      $region84: #{tpu_custom_call.1} parent=5 // pred_fallthru
        _
    $region6: #{tpu_custom_call.1} parent=1 // loop_footer
      %s12 = sadd.s32 1, %s8
    $region7: #{tpu_custom_call.1} parent=1 // loop_footer_branch
      %7 = sbr.rel target = $region3
    $region8: #{tpu_custom_call.1} parent=1 // loop_exit
      _

</llo_original>
